<compile_context>
chip_gen: v7x
topology: tpu7x:2x2x1
jax: 0.10.0
libtpu: 0.0.40
codegen_flags: <defaults>
</compile_context>

<pallas_src>
import functools

import jax
import jax.numpy as jnp
from jax.experimental import pallas as pl
from jax.experimental.pallas import tpu as pltpu


# murmur3 fmix32 constants (wrapped int32 literals) and per-stream salts.
_FMIX_M1 = -2048144789        # 0x85EBCA6B
_FMIX_M2 = -1028477387        # 0xC2B2AE35
_GOLD = -1640531527           # 0x9E3779B9
_FEAT_SALT = 1013904242       # scalar-feature stream
_VEC_SALT = 1640531527        # vector-channel stream
_DIV3_MAGIC = 21846           # ceil(2^16/3): (l*21846)>>16 == l//3 for l < 32768
_BITS23 = (1 << 23) - 1


def _srl(x, n):
    """Logical right shift of an int32 array by a static amount."""
    return jax.lax.shift_right_logical(x, jnp.full(x.shape, n, dtype=jnp.int32))


def _dropout_slab_kernel(seed_ref, x_ref, o_ref, *, thresh, inv_keep, width,
                         group, block_rows, salt):
    """Dropout over one (block_rows, width) slab of a flat element stream.

    group == 1: independent per-element keep decisions (nn.Dropout).
    group == 3: one decision shared by 3 consecutive flat elements (= one vector
                channel; width % 3 == 0 so every row starts on a channel
                boundary), matching _VDropout.
    """
    salted = seed_ref[0] * jnp.int32(_GOLD) + jnp.int32(salt)
    bn, w = x_ref.shape
    row0 = pl.program_id(0) * block_rows

    r = jax.lax.broadcasted_iota(jnp.int32, (bn, w), 0) + row0
    l = jax.lax.broadcasted_iota(jnp.int32, (bn, w), 1)
    if group == 1:
        counter = r * jnp.int32(width) + l
    else:
        lane_div3 = (l * jnp.int32(_DIV3_MAGIC)) >> 16       # == l // 3 (l < 32768)
        counter = r * jnp.int32(width // 3) + lane_div3

    # murmur3 fmix32 of (counter ^ salted); low 23 bits are the uniform sample.
    h = counter ^ salted
    h = h ^ _srl(h, 16)
    h = h * jnp.int32(_FMIX_M1)
    h = h ^ _srl(h, 13)
    h = h * jnp.int32(_FMIX_M2)
    h = h ^ _srl(h, 16)
    bits = h & jnp.int32(_BITS23)

    x = x_ref[...]
    scale = jnp.asarray(inv_keep, dtype=x.dtype)              # native-dtype math
    o_ref[...] = jnp.where(bits >= jnp.int32(thresh), x * scale,
                           jnp.zeros_like(x))


def _vmem_budget_bytes():
    """Aggregate budget for the double-buffered in+out tiles (trace-time)."""
    try:
        cap = int(pltpu.get_tpu_info().vmem_capacity_bytes)
    except Exception:
        cap = 64 * 1024 * 1024        # conservative (v7x-sized) fallback
    # ~70% of physical VMEM, capped to leave compiler scratch headroom
    # (=> ~45 MiB on v7x's 64 MiB, ~90 MiB on v5e/v6e's 128 MiB).
    return min(int(cap * 0.70), 96 * 1024 * 1024)


def _pick_width(total, unit, max_width):
    """Largest multiple of `unit` (<= max_width) that divides `total`, else 0."""
    w = (max_width // unit) * unit
    while w >= unit:
        if total % w == 0:
            return w
        w -= unit
    return 0


def _run_dropout(x2d, seed_arr, *, rate, salt, group, vmem_budget):
    rows, width = x2d.shape
    elem = x2d.dtype.itemsize
    # 1 input + 1 output stream, each double-buffered by the BlockSpec pipeline.
    bn = vmem_budget // (4 * width * elem)
    bn = max(8, (bn // 8) * 8)
    if bn >= rows:
        bn = rows
    grid = (pl.cdiv(rows, bn),)
    tile_bytes = 4 * bn * width * elem
    vmem_limit = int(min(max(tile_bytes + (4 << 20), 32 << 20), 128 << 20))

    kernel = functools.partial(
        _dropout_slab_kernel,
        thresh=int(round(rate * (1 << 23))),
        inv_keep=1.0 / (1.0 - rate),
        width=width, group=group, block_rows=bn, salt=salt)

    return pl.pallas_call(
        kernel,
        out_shape=jax.ShapeDtypeStruct((rows, width), x2d.dtype),
        grid_spec=pltpu.PrefetchScalarGridSpec(
            num_scalar_prefetch=1,                           # seed -> SMEM
            grid=grid,
            in_specs=[pl.BlockSpec((bn, width), lambda i, _seed: (i, 0))],
            out_specs=pl.BlockSpec((bn, width), lambda i, _seed: (i, 0)),
        ),
        compiler_params=pltpu.CompilerParams(
            # Row tiles are independent and the counter RNG is grid-invariant,
            # so the row grid may be sharded across TensorCores (v7x megacore).
            dimension_semantics=("parallel",),
            vmem_limit_bytes=vmem_limit,
        ),
    )(seed_arr, x2d)


def gvp_dropout(feats, vectors, *, rate, seed=0, training=True):
    """JAX/Pallas equivalent of GVPDropout.forward(feats, vectors)."""
    if (not training) or rate == 0.0:
        return feats, vectors
    if not (0.0 <= rate < 1.0):
        raise ValueError(f"dropout rate must be in [0, 1), got {rate}")
    if vectors.shape[-1] != 3:
        raise ValueError("vectors must have a trailing dimension of size 3")

    seed_arr = jnp.asarray([seed], dtype=jnp.int32)
    budget = _vmem_budget_bytes()

    # ---- scalar features: independent element-wise dropout (nn.Dropout) ----
    f_shape = feats.shape
    total_f = int(feats.size)
    wf = _pick_width(total_f, 128, 2048)
    if wf:                                           # lane-dense contiguous view
        f2d = feats.reshape(total_f // wf, wf)
    else:                                            # fallback: keep trailing dim
        f2d = feats.reshape(-1, f_shape[-1] if feats.ndim > 1 else total_f)
    f_out = _run_dropout(f2d, seed_arr, rate=rate, salt=_FEAT_SALT, group=1,
                         vmem_budget=budget).reshape(f_shape)

    # ---- vector features: one decision per channel (_VDropout) -------------
    v_shape = vectors.shape
    total_v = int(vectors.size)
    wv = _pick_width(total_v, 384, 1920)             # 384 = 3*128: triplet-aligned
    if wv:
        v2d = vectors.reshape(total_v // wv, wv)
    else:
        v2d = vectors.reshape(-1, v_shape[-2] * 3)
        if v2d.shape[1] >= 32768:
            raise ValueError("too many vector channels for the div-by-3 fast path")
    v_out = _run_dropout(v2d, seed_arr, rate=rate, salt=_VEC_SALT, group=3,
                         vmem_budget=budget).reshape(v_shape)

    return f_out, v_out


if __name__ == "__main__":
    import numpy as np

    key = jax.random.PRNGKey(0)
    k_f, k_v = jax.random.split(key)

    # Small shapes consistent with GVP usage: N nodes, S scalar feats,
    # V vector channels of dimension 3.
    N, S, V = 64, 96, 16
    RATE = 0.2

    feats = jax.random.normal(k_f, (N, S), dtype=jnp.float32)
    vectors = jax.random.normal(k_v, (N, V, 3), dtype=jnp.float32)

    fo, vo = gvp_dropout(feats, vectors, rate=RATE, seed=1234, training=True)
    fo = jax.block_until_ready(fo)
    vo = jax.block_until_ready(vo)

    # --- deterministic sanity checks on dropout semantics -------------------
    f_out = np.asarray(fo)
    f_in = np.asarray(feats)
    scaled = f_in / (1.0 - RATE)
    # every output element is either 0 (dropped) or the scaled input (kept)
    ok_feat = np.all(np.isclose(f_out, 0.0, atol=1e-7)
                     | np.isclose(f_out, scaled, rtol=1e-5, atol=1e-6))

    v_out = np.asarray(vo)
    v_in = np.asarray(vectors)
    v_scaled = v_in / (1.0 - RATE)
    # a vector channel is dropped as a whole: per-(N,V) channel all-zero or all-kept
    ch_zero = np.all(np.isclose(v_out, 0.0, atol=1e-7), axis=-1)
    ch_kept = np.all(np.isclose(v_out, v_scaled, rtol=1e-5, atol=1e-6), axis=-1)
    ok_vec = np.all(ch_zero | ch_kept)

    assert ok_feat, "scalar dropout semantics violated"
    assert ok_vec, "vector-channel dropout semantics violated"

    # masks are neither degenerate all-kept nor all-dropped
    n_drop_f = int(np.sum(np.isclose(f_out, 0.0, atol=1e-7)))
    assert 0 < n_drop_f < f_out.size, "feat mask degenerate"
    n_drop_v = int(np.sum(ch_zero))
    assert 0 < n_drop_v < ch_zero.size, "vector mask degenerate"

    # eval mode is identity
    fe, ve = gvp_dropout(feats, vectors, rate=RATE, training=False)
    assert fe is feats and ve is vectors

    print("KERNEL_OK")
</pallas_src>

<mosaic_0001>
module attributes {stable_mosaic.version = 11 : i64} {
  func.func @_dropout_slab_kernel(%arg0: i32, %arg1: memref<1xi32, #tpu.memory_space<smem>>, %arg2: memref<3x2048xf32, #tpu.memory_space<vmem>>, %arg3: memref<3x2048xf32, #tpu.memory_space<vmem>>) attributes {dimension_semantics = [#tpu.dimension_semantics<parallel>], iteration_bounds = array<i64: 1>, scalar_prefetch = 1 : i64, scratch_operands = 0 : i64, tpu.core_type = #tpu.core_type<tc>, window_params = [{transform_indices = @transform_0, window_bounds = array<i64: 3, 2048>}, {transform_indices = @transform_1, window_bounds = array<i64: 3, 2048>}]} {
    %c0 = arith.constant 0 : index
    %0 = memref.load %arg1[%c0] : memref<1xi32, #tpu.memory_space<smem>>
    %c-1640531527_i32 = arith.constant -1640531527 : i32
    %1 = arith.muli %0, %c-1640531527_i32 : i32
    %c1013904242_i32 = arith.constant 1013904242 : i32
    %2 = arith.addi %1, %c1013904242_i32 : i32
    %c3_i32 = arith.constant 3 : i32
    %3 = arith.muli %arg0, %c3_i32 : i32
    %4 = tpu.iota {dimensions = array<i32: 0>} : vector<3x2048xi32>
    %5 = vector.broadcast %3 : i32 to vector<3x2048xi32>
    %6 = arith.addi %4, %5 : vector<3x2048xi32>
    %7 = tpu.iota {dimensions = array<i32: 1>} : vector<3x2048xi32>
    %c2048_i32 = arith.constant 2048 : i32
    %8 = vector.broadcast %c2048_i32 : i32 to vector<3x2048xi32>
    %9 = arith.muli %6, %8 : vector<3x2048xi32>
    %10 = arith.addi %9, %7 : vector<3x2048xi32>
    %11 = vector.broadcast %2 : i32 to vector<3x2048xi32>
    %12 = arith.xori %10, %11 : vector<3x2048xi32>
    %c16_i32 = arith.constant 16 : i32
    %13 = vector.broadcast %c16_i32 : i32 to vector<3x2048xi32>
    %14 = arith.shrui %12, %13 : vector<3x2048xi32>
    %15 = arith.xori %12, %14 : vector<3x2048xi32>
    %c-2048144789_i32 = arith.constant -2048144789 : i32
    %16 = vector.broadcast %c-2048144789_i32 : i32 to vector<3x2048xi32>
    %17 = arith.muli %15, %16 : vector<3x2048xi32>
    %c13_i32 = arith.constant 13 : i32
    %18 = vector.broadcast %c13_i32 : i32 to vector<3x2048xi32>
    %19 = arith.shrui %17, %18 : vector<3x2048xi32>
    %20 = arith.xori %17, %19 : vector<3x2048xi32>
    %c-1028477387_i32 = arith.constant -1028477387 : i32
    %21 = vector.broadcast %c-1028477387_i32 : i32 to vector<3x2048xi32>
    %22 = arith.muli %20, %21 : vector<3x2048xi32>
    %c16_i32_0 = arith.constant 16 : i32
    %23 = vector.broadcast %c16_i32_0 : i32 to vector<3x2048xi32>
    %24 = arith.shrui %22, %23 : vector<3x2048xi32>
    %25 = arith.xori %22, %24 : vector<3x2048xi32>
    %c8388607_i32 = arith.constant 8388607 : i32
    %26 = vector.broadcast %c8388607_i32 : i32 to vector<3x2048xi32>
    %27 = arith.andi %25, %26 : vector<3x2048xi32>
    %c0_1 = arith.constant 0 : index
    %c0_2 = arith.constant 0 : index
    %28 = vector.load %arg2[%c0_1, %c0_2] : memref<3x2048xf32, #tpu.memory_space<vmem>>, vector<3x2048xf32>
    %c1677722_i32 = arith.constant 1677722 : i32
    %29 = vector.broadcast %c1677722_i32 : i32 to vector<3x2048xi32>
    %30 = arith.cmpi sge, %27, %29 : vector<3x2048xi32>
    %cst = arith.constant 1.250000e+00 : f32
    %31 = vector.broadcast %cst : f32 to vector<3x2048xf32>
    %32 = arith.mulf %28, %31 : vector<3x2048xf32>
    %cst_3 = arith.constant 0.000000e+00 : f32
    %33 = vector.broadcast %cst_3 : f32 to vector<3x2048xf32>
    %34 = arith.select %30, %32, %33 : vector<3x2048xi1>, vector<3x2048xf32>
    %c0_4 = arith.constant 0 : index
    %c0_5 = arith.constant 0 : index
    %35 = vector.load %arg3[%c0_4, %c0_5] : memref<3x2048xf32, #tpu.memory_space<vmem>>, vector<3x2048xf32>
    tpu.vector_store %arg3[%c0_4, %c0_5], %34 {strides = array<i32>} : memref<3x2048xf32, #tpu.memory_space<vmem>>, vector<3x2048xf32>,
    return
  }
  func.func @transform_0(%arg0: i32, %arg1: memref<1xi32, #tpu.memory_space<smem>>) -> (i32, i32) {
    %c0_i32 = arith.constant 0 : i32
    %c0_i32_0 = arith.constant 0 : i32
    return %arg0, %c0_i32 : i32, i32
  }
  func.func @transform_1(%arg0: i32, %arg1: memref<1xi32, #tpu.memory_space<smem>>) -> (i32, i32) {
    %c0_i32 = arith.constant 0 : i32
    %c0_i32_0 = arith.constant 0 : i32
    return %arg0, %c0_i32 : i32, i32
  }
}

</mosaic_0001>

<llo_original>
// kernel: tpu_custom_call.1
$region0: #{tpu_custom_call.1}
  #allocation0 [shape = 'u32[]', space=smem, size = 0x4, offset = 0x4, fixed_abs, tag = 'smem constant byte address 0x4 - core index']
  #allocation1 [shape = 'u32[144,128]{1,0:T(1,128)}', space=vmem, size = 0x12000, scoped, tag = 'internal scratch']
  #allocation2 [shape = 's32[1]{0}', space=sflag, size = 0x4, scoped, tag = 'scoped memory for tpu_custom_call.1']
  #allocation3 [shape = 's32[1]{0:T(128)S(6)}', space=smem, size = 0x200, scoped, tag = 'prefetched SMEM operand 0']
  %s0 = inlined_call_operand.<no memory space> [shape: s32[1], index: 0, kind: input, shape index: {}]
  %s1 = inlined_call_operand.hbm [shape: f32[3,2048], index: 1, kind: input, shape index: {}]
  %s2 = inlined_call_operand.hbm [shape: f32[3,2048], index: 2, kind: output, shape index: {}]
  %s3 = sld [smem:[#allocation0]]
  $region18: #{tpu_custom_call.1} parent=0
    _
  %s5 = ssub.s32 1, %s3
  %s6 = scalar_select 0, %s5, %s3
  %7 = sst [smem:[#allocation3]] %s0
  $region1: #{tpu_custom_call.1} parent=0
    #allocation4 [shape = 'u8[32768]{0}', space=vmem, size = 0x8000, scoped, tag = 'input window, operand 1, single buffered']
    #allocation5 [shape = 's32[1]{0}', space=sflag, size = 0x4, scoped, tag = 'scoped memory for tpu_custom_call.1']
    #allocation6 [shape = 's32[1]{0}', space=sflag, size = 0x4, scoped, tag = 'scoped memory for tpu_custom_call.1']
    #allocation7 [shape = 'u8[32768]{0}', space=vmem, size = 0x8000, scoped, tag = 'output window, operand 0, single buffered']
    %8 = vsyncpa [#allocation5], 0
    %9 = vsyncpa [#allocation6], 0
    // Predicated region
    $region2: #{tpu_custom_call.1} parent=1 // pred_check
      _
    $region3: #{tpu_custom_call.1} parent=1 // pred_check_branch
      %11 = sbr.rel (0) target = $region5
    $region4: #{tpu_custom_call.1} parent=1 // pred_region
      %s13 = ssub.s32 1024, 1024
      %14 = vsyncadd [#allocation5], %s13
      %s16 = sshll.u32 [#allocation4], 4
      %s17 = int_to_ptr.vmem [resolvable:$true] %s16
      %19 = dma.hbm_to_vmem [thread:$0]  %s1, 1024, %s17, [#allocation5]
    $region5: #{tpu_custom_call.1} parent=1 // pred_fallthru
      _
    // Predicated region
    $region6: #{tpu_custom_call.1} parent=1 // pred_check
      _
    $region7: #{tpu_custom_call.1} parent=1 // pred_check_branch
      %21 = sbr.rel (0) target = $region9
    $region8: #{tpu_custom_call.1} parent=1 // pred_region
      %22 = dma.done [#allocation5], 1024
    $region9: #{tpu_custom_call.1} parent=1 // pred_fallthru
      _
    %s23 = sld [smem:[#allocation3]]
    %s24 = smul.u32 %s23, 2654435769
    %s25 = sadd.s32 %s24, 1013904242
    %s26 = smul.u32 0, 3
    %v27 = vlaneseq
    %v28 = vshrl.u32 %v27, 7
    %v29 = vstv %s26
    %v30 = vadd.s32 %v28, %v29
    %v31 = vlaneseq
    %v32 = vand.u32 %v31, 127
    %v33 = vadd.s32 %v32, 128
    %v34 = vadd.s32 %v32, 256
    %v35 = vadd.s32 %v32, 384
    %v36 = vadd.s32 %v32, 512
    %v37 = vadd.s32 %v32, 640
    %v38 = vadd.s32 %v32, 768
    %v39 = vadd.s32 %v32, 896
    %v40 = vadd.s32 %v32, 1024
    %v41 = vadd.s32 %v32, 1152
    %v42 = vadd.s32 %v32, 1280
    %v43 = vadd.s32 %v32, 1408
    %v44 = vadd.s32 %v32, 1536
    %v45 = vadd.s32 %v32, 1664
    %v46 = vadd.s32 %v32, 1792
    %v47 = vadd.s32 %v32, 1920
    %v48 = vmul.u32 %v30, 2048
    %v49 = vadd.s32 %v48, %v32
    %v50 = vadd.s32 %v48, %v33
    %v51 = vadd.s32 %v48, %v34
    %v52 = vadd.s32 %v48, %v35
    %v53 = vadd.s32 %v48, %v36
    %v54 = vadd.s32 %v48, %v37
    %v55 = vadd.s32 %v48, %v38
    %v56 = vadd.s32 %v48, %v39
    %v57 = vadd.s32 %v48, %v40
    %v58 = vadd.s32 %v48, %v41
    %v59 = vadd.s32 %v48, %v42
    %v60 = vadd.s32 %v48, %v43
    %v61 = vadd.s32 %v48, %v44
    %v62 = vadd.s32 %v48, %v45
    %v63 = vadd.s32 %v48, %v46
    %v64 = vadd.s32 %v48, %v47
    %v65 = vstv %s25
    %v66 = vxor.u32 %v49, %v65
    %v67 = vxor.u32 %v50, %v65
    %v68 = vxor.u32 %v51, %v65
    %v69 = vxor.u32 %v52, %v65
    %v70 = vxor.u32 %v53, %v65
    %v71 = vxor.u32 %v54, %v65
    %v72 = vxor.u32 %v55, %v65
    %v73 = vxor.u32 %v56, %v65
    %v74 = vxor.u32 %v57, %v65
    %v75 = vxor.u32 %v58, %v65
    %v76 = vxor.u32 %v59, %v65
    %v77 = vxor.u32 %v60, %v65
    %v78 = vxor.u32 %v61, %v65
    %v79 = vxor.u32 %v62, %v65
    %v80 = vxor.u32 %v63, %v65
    %v81 = vxor.u32 %v64, %v65
    %v82 = vshrl.u32 %v66, 16
    %v83 = vshrl.u32 %v67, 16
    %v84 = vshrl.u32 %v68, 16
    %v85 = vshrl.u32 %v69, 16
    %v86 = vshrl.u32 %v70, 16
    %v87 = vshrl.u32 %v71, 16
    %v88 = vshrl.u32 %v72, 16
    %v89 = vshrl.u32 %v73, 16
    %v90 = vshrl.u32 %v74, 16
    %v91 = vshrl.u32 %v75, 16
    %v92 = vshrl.u32 %v76, 16
    %v93 = vshrl.u32 %v77, 16
    %v94 = vshrl.u32 %v78, 16
    %v95 = vshrl.u32 %v79, 16
    %v96 = vshrl.u32 %v80, 16
    %v97 = vshrl.u32 %v81, 16
    %v98 = vxor.u32 %v66, %v82
    %v99 = vxor.u32 %v67, %v83
    %v100 = vxor.u32 %v68, %v84
    %v101 = vxor.u32 %v69, %v85
    %v102 = vxor.u32 %v70, %v86
    %v103 = vxor.u32 %v71, %v87
    %v104 = vxor.u32 %v72, %v88
    %v105 = vxor.u32 %v73, %v89
    %v106 = vxor.u32 %v74, %v90
    %v107 = vxor.u32 %v75, %v91
    %v108 = vxor.u32 %v76, %v92
    %v109 = vxor.u32 %v77, %v93
    %v110 = vxor.u32 %v78, %v94
    %v111 = vxor.u32 %v79, %v95
    %v112 = vxor.u32 %v80, %v96
    %v113 = vxor.u32 %v81, %v97
    %v114 = vmul.u32 %v98, 2246822507
    %v115 = vmul.u32 %v99, 2246822507
    %v116 = vmul.u32 %v100, 2246822507
    %v117 = vmul.u32 %v101, 2246822507
    %v118 = vmul.u32 %v102, 2246822507
    %v119 = vmul.u32 %v103, 2246822507
    %v120 = vmul.u32 %v104, 2246822507
    %v121 = vmul.u32 %v105, 2246822507
    %v122 = vmul.u32 %v106, 2246822507
    %v123 = vmul.u32 %v107, 2246822507
    %v124 = vmul.u32 %v108, 2246822507
    %v125 = vmul.u32 %v109, 2246822507
    %v126 = vmul.u32 %v110, 2246822507
    %v127 = vmul.u32 %v111, 2246822507
    %v128 = vmul.u32 %v112, 2246822507
    %v129 = vmul.u32 %v113, 2246822507
    %v130 = vshrl.u32 %v114, 13
    %v131 = vshrl.u32 %v115, 13
    %v132 = vshrl.u32 %v116, 13
    %v133 = vshrl.u32 %v117, 13
    %v134 = vshrl.u32 %v118, 13
    %v135 = vshrl.u32 %v119, 13
    %v136 = vshrl.u32 %v120, 13
    %v137 = vshrl.u32 %v121, 13
    %v138 = vshrl.u32 %v122, 13
    %v139 = vshrl.u32 %v123, 13
    %v140 = vshrl.u32 %v124, 13
    %v141 = vshrl.u32 %v125, 13
    %v142 = vshrl.u32 %v126, 13
    %v143 = vshrl.u32 %v127, 13
    %v144 = vshrl.u32 %v128, 13
    %v145 = vshrl.u32 %v129, 13
    %v146 = vxor.u32 %v114, %v130
    %v147 = vxor.u32 %v115, %v131
    %v148 = vxor.u32 %v116, %v132
    %v149 = vxor.u32 %v117, %v133
    %v150 = vxor.u32 %v118, %v134
    %v151 = vxor.u32 %v119, %v135
    %v152 = vxor.u32 %v120, %v136
    %v153 = vxor.u32 %v121, %v137
    %v154 = vxor.u32 %v122, %v138
    %v155 = vxor.u32 %v123, %v139
    %v156 = vxor.u32 %v124, %v140
    %v157 = vxor.u32 %v125, %v141
    %v158 = vxor.u32 %v126, %v142
    %v159 = vxor.u32 %v127, %v143
    %v160 = vxor.u32 %v128, %v144
    %v161 = vxor.u32 %v129, %v145
    %v162 = vmul.u32 %v146, 3266489909
    %v163 = vmul.u32 %v147, 3266489909
    %v164 = vmul.u32 %v148, 3266489909
    %v165 = vmul.u32 %v149, 3266489909
    %v166 = vmul.u32 %v150, 3266489909
    %v167 = vmul.u32 %v151, 3266489909
    %v168 = vmul.u32 %v152, 3266489909
    %v169 = vmul.u32 %v153, 3266489909
    %v170 = vmul.u32 %v154, 3266489909
    %v171 = vmul.u32 %v155, 3266489909
    %v172 = vmul.u32 %v156, 3266489909
    %v173 = vmul.u32 %v157, 3266489909
    %v174 = vmul.u32 %v158, 3266489909
    %v175 = vmul.u32 %v159, 3266489909
    %v176 = vmul.u32 %v160, 3266489909
    %v177 = vmul.u32 %v161, 3266489909
    %v178 = vshrl.u32 %v162, 16
    %v179 = vshrl.u32 %v163, 16
    %v180 = vshrl.u32 %v164, 16
    %v181 = vshrl.u32 %v165, 16
    %v182 = vshrl.u32 %v166, 16
    %v183 = vshrl.u32 %v167, 16
    %v184 = vshrl.u32 %v168, 16
    %v185 = vshrl.u32 %v169, 16
    %v186 = vshrl.u32 %v170, 16
    %v187 = vshrl.u32 %v171, 16
    %v188 = vshrl.u32 %v172, 16
    %v189 = vshrl.u32 %v173, 16
    %v190 = vshrl.u32 %v174, 16
    %v191 = vshrl.u32 %v175, 16
    %v192 = vshrl.u32 %v176, 16
    %v193 = vshrl.u32 %v177, 16
    %v194 = vxor.u32 %v162, %v178
    %v195 = vxor.u32 %v163, %v179
    %v196 = vxor.u32 %v164, %v180
    %v197 = vxor.u32 %v165, %v181
    %v198 = vxor.u32 %v166, %v182
    %v199 = vxor.u32 %v167, %v183
    %v200 = vxor.u32 %v168, %v184
    %v201 = vxor.u32 %v169, %v185
    %v202 = vxor.u32 %v170, %v186
    %v203 = vxor.u32 %v171, %v187
    %v204 = vxor.u32 %v172, %v188
    %v205 = vxor.u32 %v173, %v189
    %v206 = vxor.u32 %v174, %v190
    %v207 = vxor.u32 %v175, %v191
    %v208 = vxor.u32 %v176, %v192
    %v209 = vxor.u32 %v177, %v193
    %v210 = vand.u32 %v194, 8388607
    %v211 = vand.u32 %v195, 8388607
    %v212 = vand.u32 %v196, 8388607
    %v213 = vand.u32 %v197, 8388607
    %v214 = vand.u32 %v198, 8388607
    %v215 = vand.u32 %v199, 8388607
    %v216 = vand.u32 %v200, 8388607
    %v217 = vand.u32 %v201, 8388607
    %v218 = vand.u32 %v202, 8388607
    %v219 = vand.u32 %v203, 8388607
    %v220 = vand.u32 %v204, 8388607
    %v221 = vand.u32 %v205, 8388607
    %v222 = vand.u32 %v206, 8388607
    %v223 = vand.u32 %v207, 8388607
    %v224 = vand.u32 %v208, 8388607
    %v225 = vand.u32 %v209, 8388607
    %v226 = vld [vmem:[#allocation4] sm:$0x77]
    %v227 = vld [vmem:[#allocation4 + $0x8] sm:$0x77]
    %v228 = vld [vmem:[#allocation4 + $0x10] sm:$0x77]
    %v229 = vld [vmem:[#allocation4 + $0x18] sm:$0x77]
    %v230 = vld [vmem:[#allocation4 + $0x20] sm:$0x77]
    %v231 = vld [vmem:[#allocation4 + $0x28] sm:$0x77]
    %v232 = vld [vmem:[#allocation4 + $0x30] sm:$0x77]
    %v233 = vld [vmem:[#allocation4 + $0x38] sm:$0x77]
    %vm234 = vcmp.ge.s32.totalorder %v210, 1677722
    %vm235 = vcmp.ge.s32.totalorder %v211, 1677722
    %vm236 = vcmp.ge.s32.totalorder %v212, 1677722
    %vm237 = vcmp.ge.s32.totalorder %v213, 1677722
    %vm238 = vcmp.ge.s32.totalorder %v214, 1677722
    %vm239 = vcmp.ge.s32.totalorder %v215, 1677722
    %vm240 = vcmp.ge.s32.totalorder %v216, 1677722
    %vm241 = vcmp.ge.s32.totalorder %v217, 1677722
    %vm242 = vcmp.ge.s32.totalorder %v218, 1677722
    %vm243 = vcmp.ge.s32.totalorder %v219, 1677722
    %vm244 = vcmp.ge.s32.totalorder %v220, 1677722
    %vm245 = vcmp.ge.s32.totalorder %v221, 1677722
    %vm246 = vcmp.ge.s32.totalorder %v222, 1677722
    %vm247 = vcmp.ge.s32.totalorder %v223, 1677722
    %vm248 = vcmp.ge.s32.totalorder %v224, 1677722
    %vm249 = vcmp.ge.s32.totalorder %v225, 1677722
    %v250 = vmul.f32 %v226, 1.25
    %v251 = vmul.f32 %v227, 1.25
    %v252 = vmul.f32 %v228, 1.25
    %v253 = vmul.f32 %v229, 1.25
    %v254 = vmul.f32 %v230, 1.25
    %v255 = vmul.f32 %v231, 1.25
    %v256 = vmul.f32 %v232, 1.25
    %v257 = vmul.f32 %v233, 1.25
    %v266 = vcombine.high %v250, %v250
    %v267 = vcombine.high %v251, %v251
    %v268 = vcombine.high %v252, %v252
    %v269 = vcombine.high %v253, %v253
    %v270 = vcombine.high %v254, %v254
    %v271 = vcombine.high %v255, %v255
    %v272 = vcombine.high %v256, %v256
    %v273 = vcombine.high %v257, %v257
    %v282 = vsel %vm234, %v250, 0.0
    %v283 = vsel %vm235, %v266, 0.0
    %v284 = vsel %vm236, %v251, 0.0
    %v285 = vsel %vm237, %v267, 0.0
    %v286 = vsel %vm238, %v252, 0.0
    %v287 = vsel %vm239, %v268, 0.0
    %v288 = vsel %vm240, %v253, 0.0
    %v289 = vsel %vm241, %v269, 0.0
    %v290 = vsel %vm242, %v254, 0.0
    %v291 = vsel %vm243, %v270, 0.0
    %v292 = vsel %vm244, %v255, 0.0
    %v293 = vsel %vm245, %v271, 0.0
    %v294 = vsel %vm246, %v256, 0.0
    %v295 = vsel %vm247, %v272, 0.0
    %v296 = vsel %vm248, %v257, 0.0
    %v297 = vsel %vm249, %v273, 0.0
    %v314 = vcombine.low %v282, %v283
    %v315 = vcombine.low %v284, %v285
    %v316 = vcombine.low %v286, %v287
    %v317 = vcombine.low %v288, %v289
    %v318 = vcombine.low %v290, %v291
    %v319 = vcombine.low %v292, %v293
    %v320 = vcombine.low %v294, %v295
    %v321 = vcombine.low %v296, %v297
    %330 = vst [vmem:[#allocation7] sm:$0x77] %v314
    %331 = vst [vmem:[#allocation7 + $0x8] sm:$0x77] %v315
    %332 = vst [vmem:[#allocation7 + $0x10] sm:$0x77] %v316
    %333 = vst [vmem:[#allocation7 + $0x18] sm:$0x77] %v317
    %334 = vst [vmem:[#allocation7 + $0x20] sm:$0x77] %v318
    %335 = vst [vmem:[#allocation7 + $0x28] sm:$0x77] %v319
    %336 = vst [vmem:[#allocation7 + $0x30] sm:$0x77] %v320
    %337 = vst [vmem:[#allocation7 + $0x38] sm:$0x77] %v321
    // Predicated region
    $region10: #{tpu_custom_call.1} parent=1 // pred_check
      _
    $region11: #{tpu_custom_call.1} parent=1 // pred_check_branch
      %339 = sbr.rel (0) target = $region13
    $region12: #{tpu_custom_call.1} parent=1 // pred_region
      %s341 = ssub.s32 1024, 1024
      %342 = vsyncadd [#allocation6], %s341
      %s344 = sshll.u32 [#allocation7], 4
      %s345 = int_to_ptr.vmem [resolvable:$true] %s344
      %347 = dma.vmem_to_hbm [thread:$0]  %s345, 1024, %s2, [#allocation6]
    $region13: #{tpu_custom_call.1} parent=1 // pred_fallthru
      _
    // Predicated region
    $region14: #{tpu_custom_call.1} parent=1 // pred_check
      _
    $region15: #{tpu_custom_call.1} parent=1 // pred_check_branch
      %349 = sbr.rel (0) target = $region17
    $region16: #{tpu_custom_call.1} parent=1 // pred_region
      %350 = dma.done [#allocation6], 1024
    $region17: #{tpu_custom_call.1} parent=1 // pred_fallthru
      _
    %351 = vsyncpa [#allocation5], 1
    %352 = vsyncpa [#allocation6], 1

</llo_original>
